<compile_context>
chip_gen: v6e
topology: v6e:2x2x1
jax: 0.10.0
libtpu: 0.0.40
codegen_flags: <defaults>
</compile_context>

<pallas_src>
import functools

import jax
import jax.numpy as jnp
from jax import lax
from jax.experimental import pallas as pl
from jax.experimental.pallas import tpu as pltpu


def _nona_kernel(train_ref, xx_ref, nn_ref, x_ref, xn_ref, yn_ref, out_ref,
                 m_ref, l_ref, acc_ref, *, similarity, tb, tn, n_valid,
                 maybe_train):
    """One (B-tile, N-tile) step of the online-softmax NONA forward.

    train_ref : SMEM (1,) int32 (scalar prefetch)  — torch.equal(x, x_n) flag
    xx_ref    : VMEM (tb, 1)    — ||x||^2 for this B tile
    nn_ref    : VMEM (1, tn)    — ||x_n||^2 for this N tile
    x_ref     : VMEM (tb, Dp)
    xn_ref    : VMEM (tn, Dp)
    yn_ref    : VMEM (tn, Kp)
    out_ref   : VMEM (tb, Kp)   — written only on the last N tile
    m/l/acc   : VMEM scratch (tb,1), (tb,1), (tb,Kp) — online-softmax state
    """
    j = pl.program_id(1)

    @pl.when(j == 0)
    def _():
        m_ref[...] = jnp.full(m_ref.shape, -jnp.inf, jnp.float32)
        l_ref[...] = jnp.zeros(l_ref.shape, jnp.float32)
        acc_ref[...] = jnp.zeros(acc_ref.shape, jnp.float32)

    x = x_ref[...]                                   # (tb, Dp)
    xn = xn_ref[...]                                 # (tn, Dp)

    # x @ x_n^T on the MXU — contract last dim of both operands (no .T).
    dots = lax.dot_general(x, xn, (((1,), (1,)), ((), ())),
                           preferred_element_type=jnp.float32)   # (tb, tn)

    if similarity == 'l2':
        # -||x_i - xn_j||_2 via hoisted norms: ||x||^2 + ||xn||^2 - 2 x.xn
        d2 = jnp.maximum(xx_ref[...] + nn_ref[...] - 2.0 * dots, 0.0)
        sim = -jnp.sqrt(d2)
    else:  # 'dot'
        sim = dots

    need_col = (n_valid is not None) or maybe_train
    if need_col:
        col = lax.broadcasted_iota(jnp.int32, (tb, tn), 1) + j * tn

    # Mask zero-padded neighbor columns (statically skipped when N is aligned).
    if n_valid is not None:
        sim = jnp.where(col < n_valid, sim, -jnp.inf)

    # Self-similarity correction (training) — statically skipped when the
    # wrapper proves torch.equal(x, x_n) is impossible.
    if maybe_train:
        row = lax.broadcasted_iota(jnp.int32, (tb, tn), 0) + pl.program_id(0) * tb
        is_train = train_ref[0] == 1
        sim = jnp.where(jnp.logical_and(is_train, row == col), -jnp.inf, sim)

    # Online softmax update.
    m_prev = m_ref[...]                                          # (tb, 1)
    m_new = jnp.maximum(m_prev, jnp.max(sim, axis=1, keepdims=True))
    alpha = jnp.exp(m_prev - m_new)
    p = jnp.exp(sim - m_new)                                     # (tb, tn)
    l_ref[...] = alpha * l_ref[...] + jnp.sum(p, axis=1, keepdims=True)
    acc_ref[...] = alpha * acc_ref[...] + jnp.dot(
        p, yn_ref[...], preferred_element_type=jnp.float32)      # (tb, Kp)
    m_ref[...] = m_new

    @pl.when(j == pl.num_programs(1) - 1)
    def _():
        inv_l = pl.reciprocal(l_ref[...], approx=True)           # EUP, ~free
        out_ref[...] = jnp.clip(acc_ref[...] * inv_l, 0.0, 1.0).astype(out_ref.dtype)


def _round_up(a, m):
    return ((a + m - 1) // m) * m


def nona_forward(x, x_n, y_n, *, similarity='l2',
                 b_tile=256, n_tile=1024):
    """JAX wrapper mirroring NONA.forward (no batch_norm / softstep)."""
    x = jnp.asarray(x, jnp.float32)
    x_n = jnp.asarray(x_n, jnp.float32)
    y_n = jnp.asarray(y_n, jnp.float32)

    squeeze_out = y_n.ndim == 1
    if squeeze_out:
        y_n = y_n[:, None]

    B, D = x.shape
    N, _ = x_n.shape
    K = y_n.shape[1]

    # torch.equal(x, x_n): shapes must match AND all elements equal.
    maybe_train = (x.shape == x_n.shape)
    if maybe_train:
        train_flag = jnp.all(x == x_n).astype(jnp.int32).reshape(1)
    else:
        train_flag = jnp.zeros((1,), jnp.int32)

    # ---- padding / tiling (lane-dense: last dims multiples of 128) ----
    Dp = _round_up(D, 128)
    Kp = _round_up(K, 128)
    TB = min(b_tile, _round_up(B, 8))
    TN = min(n_tile, _round_up(N, 128))
    Bp = _round_up(B, TB)
    Np = _round_up(N, TN)

    xp = jnp.zeros((Bp, Dp), jnp.float32).at[:B, :D].set(x)
    xnp = jnp.zeros((Np, Dp), jnp.float32).at[:N, :D].set(x_n)
    ynp = jnp.zeros((Np, Kp), jnp.float32).at[:N, :K].set(y_n)

    # Hoisted squared norms (zero-padding keeps these exact).
    xx = jnp.sum(xp * xp, axis=1, keepdims=True)          # (Bp, 1)
    nn = jnp.sum(xnp * xnp, axis=1, keepdims=True).T      # (1, Np)

    grid = (Bp // TB, Np // TN)
    n_valid = N if Np != N else None

    kernel = functools.partial(
        _nona_kernel, similarity=similarity, tb=TB, tn=TN,
        n_valid=n_valid, maybe_train=maybe_train)

    cost = pl.CostEstimate(
        flops=2 * Bp * Np * Dp + 2 * Bp * Np * Kp,
        transcendentals=2 * Bp * Np,                       # sqrt + exp
        bytes_accessed=4 * (Bp * Dp + Np * Dp + Np * Kp + Bp * Kp))

    out = pl.pallas_call(
        kernel,
        out_shape=jax.ShapeDtypeStruct((Bp, Kp), jnp.float32),
        grid_spec=pltpu.PrefetchScalarGridSpec(
            num_scalar_prefetch=1,                         # train flag -> SMEM
            grid=grid,
            in_specs=[
                pl.BlockSpec((TB, 1), lambda i, j, t: (i, 0)),    # ||x||^2
                pl.BlockSpec((1, TN), lambda i, j, t: (0, j)),    # ||x_n||^2
                pl.BlockSpec((TB, Dp), lambda i, j, t: (i, 0)),   # x
                pl.BlockSpec((TN, Dp), lambda i, j, t: (j, 0)),   # x_n
                pl.BlockSpec((TN, Kp), lambda i, j, t: (j, 0)),   # y_n
            ],
            out_specs=pl.BlockSpec((TB, Kp), lambda i, j, t: (i, 0)),
            scratch_shapes=[
                pltpu.VMEM((TB, 1), jnp.float32),   # m (running max)
                pltpu.VMEM((TB, 1), jnp.float32),   # l (running denom)
                pltpu.VMEM((TB, Kp), jnp.float32),  # acc
            ],
        ),
        compiler_params=pltpu.CompilerParams(
            dimension_semantics=("parallel", "arbitrary"),
            vmem_limit_bytes=32 * 1024 * 1024,
        ),
        cost_estimate=cost,
    )(train_flag, xx, nn, xp, xnp, ynp)

    out = out[:B, :K]
    if squeeze_out:
        out = out[:, 0]
    return out


def _nona_reference(x, x_n, y_n, *, similarity='l2'):
    """Pure-JAX reference mirroring the PyTorch module (f32)."""
    x = jnp.asarray(x, jnp.float32)
    x_n = jnp.asarray(x_n, jnp.float32)
    y_n = jnp.asarray(y_n, jnp.float32)
    if similarity == 'l2':
        d2 = (jnp.sum(x * x, axis=1, keepdims=True)
              + jnp.sum(x_n * x_n, axis=1)[None, :]
              - 2.0 * x @ x_n.T)
        sim = -jnp.sqrt(jnp.maximum(d2, 0.0))
    else:
        sim = x @ x_n.T
    if x.shape == x_n.shape and bool(jnp.all(x == x_n)):
        sim = sim - jnp.diag(jnp.full((x.shape[0],), jnp.inf, jnp.float32))
    p = jax.nn.softmax(sim, axis=1)
    return jnp.clip(p @ y_n, 0.0, 1.0)


if __name__ == "__main__":
    key = jax.random.PRNGKey(0)
    k1, k2, k3, k4, k5 = jax.random.split(key, 5)

    # Case 1: training path (x == x_n) — exercises the -inf self-similarity mask.
    B, N, D = 8, 8, 32
    x = jax.random.normal(k1, (B, D), dtype=jnp.float32)
    y_n = jax.random.uniform(k2, (N, 1), dtype=jnp.float32)   # labels in [0, 1]
    out = nona_forward(x, x, y_n, similarity='l2')
    jax.block_until_ready(out)
    ref = _nona_reference(x, x, y_n, similarity='l2')
    assert out.shape == (B, 1)
    assert bool(jnp.all(jnp.isfinite(out)))
    assert bool(jnp.all((out >= 0.0) & (out <= 1.0)))
    assert bool(jnp.allclose(out, ref, atol=1e-2)), float(jnp.max(jnp.abs(out - ref)))

    # Case 2: inference path with N/D/K padding (exercises online-softmax
    # accumulation across streamed N tiles and the padded-column masking).
    B2, N2, D2, K2 = 16, 600, 20, 3
    x2 = jax.random.normal(k3, (B2, D2), dtype=jnp.float32)
    xn2 = jax.random.normal(k4, (N2, D2), dtype=jnp.float32)
    yn2 = jax.random.uniform(k5, (N2, K2), dtype=jnp.float32)
    out2 = nona_forward(x2, xn2, yn2, similarity='l2', n_tile=256)
    jax.block_until_ready(out2)
    ref2 = _nona_reference(x2, xn2, yn2, similarity='l2')
    assert out2.shape == (B2, K2)
    assert bool(jnp.all((out2 >= 0.0) & (out2 <= 1.0)))
    assert bool(jnp.allclose(out2, ref2, atol=1e-2)), float(jnp.max(jnp.abs(out2 - ref2)))

    print("KERNEL_OK")
</pallas_src>

<mosaic_0001>
module attributes {stable_mosaic.version = 11 : i64} {
  func.func @_nona_kernel(%arg0: i32, %arg1: i32, %arg2: memref<1xi32, #tpu.memory_space<smem>>, %arg3: memref<8x1xf32, #tpu.memory_space<vmem>>, %arg4: memref<1x128xf32, #tpu.memory_space<vmem>>, %arg5: memref<8x128xf32, #tpu.memory_space<vmem>>, %arg6: memref<128x128xf32, #tpu.memory_space<vmem>>, %arg7: memref<128x128xf32, #tpu.memory_space<vmem>>, %arg8: memref<8x128xf32, #tpu.memory_space<vmem>>, %arg9: memref<8x1xf32, #tpu.memory_space<vmem>>, %arg10: memref<8x1xf32, #tpu.memory_space<vmem>>, %arg11: memref<8x128xf32, #tpu.memory_space<vmem>>) attributes {dimension_semantics = [#tpu.dimension_semantics<parallel>, #tpu.dimension_semantics<arbitrary>], iteration_bounds = array<i64: 1, 1>, scalar_prefetch = 1 : i64, scratch_operands = 3 : i64, tpu.core_type = #tpu.core_type<tc>, window_params = [{transform_indices = @transform_0, window_bounds = array<i64: 8, 1>}, {transform_indices = @transform_1, window_bounds = array<i64: 1, 128>}, {transform_indices = @transform_2, window_bounds = array<i64: 8, 128>}, {transform_indices = @transform_3, window_bounds = array<i64: 128, 128>}, {transform_indices = @transform_4, window_bounds = array<i64: 128, 128>}, {transform_indices = @transform_5, window_bounds = array<i64: 8, 128>}]} {
    %c0_i32 = arith.constant 0 : i32
    %0 = arith.cmpi eq, %arg1, %c0_i32 : i32
    %1 = arith.extui %0 : i1 to i32
    %c0_i32_0 = arith.constant 0 : i32
    %2 = arith.cmpi ne, %1, %c0_i32_0 : i32
    scf.if %2 {
      %cst_34 = arith.constant 0xFF800000 : f32
      %64 = vector.broadcast %cst_34 : f32 to vector<8x1xf32>
      %c0_35 = arith.constant 0 : index
      %c0_36 = arith.constant 0 : index
      %65 = vector.load %arg9[%c0_35, %c0_36] : memref<8x1xf32, #tpu.memory_space<vmem>>, vector<8x1xf32>
      tpu.vector_store %arg9[%c0_35, %c0_36], %64 {strides = array<i32>} : memref<8x1xf32, #tpu.memory_space<vmem>>, vector<8x1xf32>,
      %cst_37 = arith.constant 0.000000e+00 : f32
      %66 = vector.broadcast %cst_37 : f32 to vector<8x1xf32>
      %c0_38 = arith.constant 0 : index
      %c0_39 = arith.constant 0 : index
      %67 = vector.load %arg10[%c0_38, %c0_39] : memref<8x1xf32, #tpu.memory_space<vmem>>, vector<8x1xf32>
      tpu.vector_store %arg10[%c0_38, %c0_39], %66 {strides = array<i32>} : memref<8x1xf32, #tpu.memory_space<vmem>>, vector<8x1xf32>,
      %cst_40 = arith.constant 0.000000e+00 : f32
      %68 = vector.broadcast %cst_40 : f32 to vector<8x128xf32>
      %c0_41 = arith.constant 0 : index
      %c0_42 = arith.constant 0 : index
      %69 = vector.load %arg11[%c0_41, %c0_42] : memref<8x128xf32, #tpu.memory_space<vmem>>, vector<8x128xf32>
      tpu.vector_store %arg11[%c0_41, %c0_42], %68 {strides = array<i32>} : memref<8x128xf32, #tpu.memory_space<vmem>>, vector<8x128xf32>,
    } else {
    }
    %c0 = arith.constant 0 : index
    %c0_1 = arith.constant 0 : index
    %3 = vector.load %arg5[%c0, %c0_1] : memref<8x128xf32, #tpu.memory_space<vmem>>, vector<8x128xf32>
    %c0_2 = arith.constant 0 : index
    %c0_3 = arith.constant 0 : index
    %4 = vector.load %arg6[%c0_2, %c0_3] : memref<128x128xf32, #tpu.memory_space<vmem>>, vector<128x128xf32>
    %cst = arith.constant dense<0.000000e+00> : vector<8x128xf32>
    %5 = tpu.matmul %3, %4, %cst {dimension_numbers = #tpu.dot_dimension_numbers<[1], [1], [0], [0], [0, 0, 1, 0], [], []>} : vector<8x128xf32>, vector<128x128xf32>, vector<8x128xf32> -> vector<8x128xf32>
    %c0_4 = arith.constant 0 : index
    %c0_5 = arith.constant 0 : index
    %6 = vector.load %arg3[%c0_4, %c0_5] : memref<8x1xf32, #tpu.memory_space<vmem>>, vector<8x1xf32>
    %c0_6 = arith.constant 0 : index
    %c0_7 = arith.constant 0 : index
    %7 = vector.load %arg4[%c0_6, %c0_7] : memref<1x128xf32, #tpu.memory_space<vmem>>, vector<1x128xf32>
    %8 = vector.broadcast %6 : vector<8x1xf32> to vector<8x128xf32>
    %9 = vector.broadcast %7 : vector<1x128xf32> to vector<8x128xf32>
    %10 = arith.addf %8, %9 : vector<8x128xf32>
    %cst_8 = arith.constant 2.000000e+00 : f32
    %11 = vector.broadcast %cst_8 : f32 to vector<8x128xf32>
    %12 = arith.mulf %11, %5 : vector<8x128xf32>
    %13 = arith.subf %10, %12 : vector<8x128xf32>
    %cst_9 = arith.constant 0.000000e+00 : f32
    %14 = vector.broadcast %cst_9 : f32 to vector<8x128xf32>
    %15 = arith.maximumf %13, %14 : vector<8x128xf32>
    %16 = math.sqrt %15 : vector<8x128xf32>
    %cst_10 = arith.constant 0.000000e+00 : f32
    %17 = vector.broadcast %cst_10 : f32 to vector<8x128xf32>
    %18 = arith.subf %17, %16 : vector<8x128xf32>
    %19 = tpu.iota {dimensions = array<i32: 1>} : vector<8x128xi32>
    %c128_i32 = arith.constant 128 : i32
    %20 = arith.muli %arg1, %c128_i32 : i32
    %21 = vector.broadcast %20 : i32 to vector<8x128xi32>
    %22 = arith.addi %19, %21 : vector<8x128xi32>
    %c8_i32 = arith.constant 8 : i32
    %23 = vector.broadcast %c8_i32 : i32 to vector<8x128xi32>
    %24 = arith.cmpi slt, %22, %23 : vector<8x128xi32>
    %cst_11 = arith.constant 0xFF800000 : f32
    %25 = vector.broadcast %cst_11 : f32 to vector<8x128xf32>
    %26 = arith.select %24, %18, %25 : vector<8x128xi1>, vector<8x128xf32>
    %27 = tpu.iota {dimensions = array<i32: 0>} : vector<8x128xi32>
    %c8_i32_12 = arith.constant 8 : i32
    %28 = arith.muli %arg0, %c8_i32_12 : i32
    %29 = vector.broadcast %28 : i32 to vector<8x128xi32>
    %30 = arith.addi %27, %29 : vector<8x128xi32>
    %c0_13 = arith.constant 0 : index
    %31 = memref.load %arg2[%c0_13] : memref<1xi32, #tpu.memory_space<smem>>
    %c1_i32 = arith.constant 1 : i32
    %32 = arith.cmpi eq, %31, %c1_i32 : i32
    %33 = arith.cmpi eq, %30, %22 : vector<8x128xi32>
    %34 = vector.broadcast %32 : i1 to vector<8x128xi1>
    %35 = arith.andi %34, %33 : vector<8x128xi1>
    %cst_14 = arith.constant 0xFF800000 : f32
    %36 = vector.broadcast %cst_14 : f32 to vector<8x128xf32>
    %37 = arith.select %35, %36, %26 : vector<8x128xi1>, vector<8x128xf32>
    %c0_15 = arith.constant 0 : index
    %c0_16 = arith.constant 0 : index
    %38 = vector.load %arg9[%c0_15, %c0_16] : memref<8x1xf32, #tpu.memory_space<vmem>>, vector<8x1xf32>
    %cst_17 = arith.constant dense<0xFF800000> : vector<8xf32>
    %39 = vector.multi_reduction <maximumf>, %37, %cst_17 [1] : vector<8x128xf32> to vector<8xf32>
    %40 = vector.shape_cast %39 : vector<8xf32> to vector<8x1xf32>
    %41 = arith.maximumf %38, %40 : vector<8x1xf32>
    %42 = arith.subf %38, %41 : vector<8x1xf32>
    %43 = math.exp %42 : vector<8x1xf32>
    %44 = vector.broadcast %41 : vector<8x1xf32> to vector<8x128xf32>
    %45 = arith.subf %37, %44 : vector<8x128xf32>
    %46 = math.exp %45 : vector<8x128xf32>
    %c0_18 = arith.constant 0 : index
    %c0_19 = arith.constant 0 : index
    %47 = vector.load %arg10[%c0_18, %c0_19] : memref<8x1xf32, #tpu.memory_space<vmem>>, vector<8x1xf32>
    %48 = arith.mulf %43, %47 : vector<8x1xf32>
    %cst_20 = arith.constant dense<0.000000e+00> : vector<8xf32>
    %49 = vector.multi_reduction <add>, %46, %cst_20 [1] : vector<8x128xf32> to vector<8xf32>
    %50 = vector.shape_cast %49 : vector<8xf32> to vector<8x1xf32>
    %51 = arith.addf %48, %50 : vector<8x1xf32>
    %c0_21 = arith.constant 0 : index
    %c0_22 = arith.constant 0 : index
    %52 = vector.load %arg10[%c0_21, %c0_22] : memref<8x1xf32, #tpu.memory_space<vmem>>, vector<8x1xf32>
    tpu.vector_store %arg10[%c0_21, %c0_22], %51 {strides = array<i32>} : memref<8x1xf32, #tpu.memory_space<vmem>>, vector<8x1xf32>,
    %c0_23 = arith.constant 0 : index
    %c0_24 = arith.constant 0 : index
    %53 = vector.load %arg11[%c0_23, %c0_24] : memref<8x128xf32, #tpu.memory_space<vmem>>, vector<8x128xf32>
    %54 = vector.broadcast %43 : vector<8x1xf32> to vector<8x128xf32>
    %55 = arith.mulf %54, %53 : vector<8x128xf32>
    %c0_25 = arith.constant 0 : index
    %c0_26 = arith.constant 0 : index
    %56 = vector.load %arg7[%c0_25, %c0_26] : memref<128x128xf32, #tpu.memory_space<vmem>>, vector<128x128xf32>
    %cst_27 = arith.constant dense<0.000000e+00> : vector<8x128xf32>
    %57 = tpu.matmul %46, %56, %cst_27 {dimension_numbers = #tpu.dot_dimension_numbers<[1], [0], [0], [1], [0, 0, 1, 1], [], []>} : vector<8x128xf32>, vector<128x128xf32>, vector<8x128xf32> -> vector<8x128xf32>
    %58 = arith.addf %55, %57 : vector<8x128xf32>
    %c0_28 = arith.constant 0 : index
    %c0_29 = arith.constant 0 : index
    %59 = vector.load %arg11[%c0_28, %c0_29] : memref<8x128xf32, #tpu.memory_space<vmem>>, vector<8x128xf32>
    tpu.vector_store %arg11[%c0_28, %c0_29], %58 {strides = array<i32>} : memref<8x128xf32, #tpu.memory_space<vmem>>, vector<8x128xf32>,
    %c0_30 = arith.constant 0 : index
    %c0_31 = arith.constant 0 : index
    %60 = vector.load %arg9[%c0_30, %c0_31] : memref<8x1xf32, #tpu.memory_space<vmem>>, vector<8x1xf32>
    tpu.vector_store %arg9[%c0_30, %c0_31], %41 {strides = array<i32>} : memref<8x1xf32, #tpu.memory_space<vmem>>, vector<8x1xf32>,
    %c0_i32_32 = arith.constant 0 : i32
    %61 = arith.cmpi eq, %arg1, %c0_i32_32 : i32
    %62 = arith.extui %61 : i1 to i32
    %c0_i32_33 = arith.constant 0 : i32
    %63 = arith.cmpi ne, %62, %c0_i32_33 : i32
    scf.if %63 {
      %c0_34 = arith.constant 0 : index
      %c0_35 = arith.constant 0 : index
      %64 = vector.load %arg10[%c0_34, %c0_35] : memref<8x1xf32, #tpu.memory_space<vmem>>, vector<8x1xf32>
      %65 = tpu.reciprocal %64 {approx = true} : vector<8x1xf32> -> vector<8x1xf32>
      %c0_36 = arith.constant 0 : index
      %c0_37 = arith.constant 0 : index
      %66 = vector.load %arg11[%c0_36, %c0_37] : memref<8x128xf32, #tpu.memory_space<vmem>>, vector<8x128xf32>
      %67 = vector.broadcast %65 : vector<8x1xf32> to vector<8x128xf32>
      %68 = arith.mulf %66, %67 : vector<8x128xf32>
      %cst_38 = arith.constant 0.000000e+00 : f32
      %cst_39 = arith.constant 1.000000e+00 : f32
      %69 = vector.broadcast %cst_38 : f32 to vector<8x128xf32>
      %70 = arith.maximumf %69, %68 : vector<8x128xf32>
      %71 = vector.broadcast %cst_39 : f32 to vector<8x128xf32>
      %72 = arith.minimumf %71, %70 : vector<8x128xf32>
      %c0_40 = arith.constant 0 : index
      %c0_41 = arith.constant 0 : index
      %73 = vector.load %arg8[%c0_40, %c0_41] : memref<8x128xf32, #tpu.memory_space<vmem>>, vector<8x128xf32>
      tpu.vector_store %arg8[%c0_40, %c0_41], %72 {strides = array<i32>} : memref<8x128xf32, #tpu.memory_space<vmem>>, vector<8x128xf32>,
    } else {
    }
    return
  }
  func.func @transform_0(%arg0: i32, %arg1: i32, %arg2: memref<1xi32, #tpu.memory_space<smem>>) -> (i32, i32) {
    %c0_i32 = arith.constant 0 : i32
    %c0_i32_0 = arith.constant 0 : i32
    return %arg0, %c0_i32 : i32, i32
  }
  func.func @transform_1(%arg0: i32, %arg1: i32, %arg2: memref<1xi32, #tpu.memory_space<smem>>) -> (i32, i32) {
    %c0_i32 = arith.constant 0 : i32
    %c0_i32_0 = arith.constant 0 : i32
    return %c0_i32, %arg1 : i32, i32
  }
  func.func @transform_2(%arg0: i32, %arg1: i32, %arg2: memref<1xi32, #tpu.memory_space<smem>>) -> (i32, i32) {
    %c0_i32 = arith.constant 0 : i32
    %c0_i32_0 = arith.constant 0 : i32
    return %arg0, %c0_i32 : i32, i32
  }
  func.func @transform_3(%arg0: i32, %arg1: i32, %arg2: memref<1xi32, #tpu.memory_space<smem>>) -> (i32, i32) {
    %c0_i32 = arith.constant 0 : i32
    %c0_i32_0 = arith.constant 0 : i32
    return %arg1, %c0_i32 : i32, i32
  }
  func.func @transform_4(%arg0: i32, %arg1: i32, %arg2: memref<1xi32, #tpu.memory_space<smem>>) -> (i32, i32) {
    %c0_i32 = arith.constant 0 : i32
    %c0_i32_0 = arith.constant 0 : i32
    return %arg1, %c0_i32 : i32, i32
  }
  func.func @transform_5(%arg0: i32, %arg1: i32, %arg2: memref<1xi32, #tpu.memory_space<smem>>) -> (i32, i32) {
    %c0_i32 = arith.constant 0 : i32
    %c0_i32_0 = arith.constant 0 : i32
    return %arg0, %c0_i32 : i32, i32
  }
}

</mosaic_0001>

<llo_original>
// kernel: tpu_custom_call.1
$region0: #{tpu_custom_call.1}
  #allocation0 [shape = 'u32[]', space=smem, size = 0x4, offset = 0x4, fixed_abs, tag = 'smem constant byte address 0x4 - core index']
  #allocation1 [shape = 'u32[144,128]{1,0:T(1,128)}', space=vmem, size = 0x12000, scoped, tag = 'internal scratch']
  #allocation2 [shape = 'f32[8,1]{1,0:T(8,128)}', space=vmem, size = 0x1000, scoped, tag = 'scratch operand']
  #allocation3 [shape = 'f32[8,1]{1,0:T(8,128)}', space=vmem, size = 0x1000, scoped, tag = 'scratch operand']
  #allocation4 [shape = 'f32[8,128]{1,0:T(8,128)}', space=vmem, size = 0x1000, scoped, tag = 'scratch operand']
  #allocation5 [shape = 's32[1]{0}', space=sflag, size = 0x4, scoped, tag = 'scoped memory for tpu_custom_call.1']
  #allocation6 [shape = 's32[1]{0:T(128)S(6)}', space=smem, size = 0x200, scoped, tag = 'prefetched SMEM operand 0']
  %s0 = inlined_call_operand.<no memory space> [shape: s32[1], index: 0, kind: input, shape index: {}]
  %s1 = inlined_call_operand.vmem [shape: f32[8,1], index: 1, kind: input, shape index: {}]
  %s2 = inlined_call_operand.vmem [shape: f32[1,128], index: 2, kind: input, shape index: {}]
  %s3 = inlined_call_operand.vmem [shape: f32[8,128], index: 3, kind: input, shape index: {}]
  %s4 = inlined_call_operand.hbm [shape: f32[128,128], index: 4, kind: input, shape index: {}]
  %s5 = inlined_call_operand.hbm [shape: f32[128,128], index: 5, kind: input, shape index: {}]
  %s6 = inlined_call_operand.hbm [shape: f32[8,128], index: 6, kind: output, shape index: {}]
  %s7 = sld [smem:[#allocation0]]
  $region46: #{tpu_custom_call.1} parent=0
    _
  %s9 = ssub.s32 1, %s7
  %s10 = scalar_select 0, %s9, %s7
  %11 = sst [smem:[#allocation6]] %s0
  $region1: #{tpu_custom_call.1} parent=0
    #allocation7 [shape = 'u8[65536]{0}', space=vmem, size = 0x10000, scoped, tag = 'input window, operand 4, single buffered']
    #allocation8 [shape = 's32[1]{0}', space=sflag, size = 0x4, scoped, tag = 'scoped memory for tpu_custom_call.1']
    #allocation9 [shape = 's32[1]{0}', space=sflag, size = 0x4, scoped, tag = 'scoped memory for tpu_custom_call.1']
    #allocation10 [shape = 'u8[65536]{0}', space=vmem, size = 0x10000, scoped, tag = 'input window, operand 5, single buffered']
    #allocation11 [shape = 's32[1]{0}', space=sflag, size = 0x4, scoped, tag = 'scoped memory for tpu_custom_call.1']
    #allocation12 [shape = 'u8[4096]{0}', space=vmem, size = 0x1000, scoped, tag = 'output window, operand 0, single buffered']
    %12 = vsyncpa [#allocation8], 0
    %13 = vsyncpa [#allocation11], 0
    %14 = vsyncpa [#allocation9], 0
    // Predicated region
    $region2: #{tpu_custom_call.1} parent=1 // pred_check
      _
    $region3: #{tpu_custom_call.1} parent=1 // pred_check_branch
      %16 = sbr.rel (0) target = $region5
    $region4: #{tpu_custom_call.1} parent=1 // pred_region
      _
    $region5: #{tpu_custom_call.1} parent=1 // pred_fallthru
      _
    // Predicated region
    $region6: #{tpu_custom_call.1} parent=1 // pred_check
      _
    $region7: #{tpu_custom_call.1} parent=1 // pred_check_branch
      %18 = sbr.rel (0) target = $region9
    $region8: #{tpu_custom_call.1} parent=1 // pred_region
      _
    $region9: #{tpu_custom_call.1} parent=1 // pred_fallthru
      _
    // Predicated region
    $region10: #{tpu_custom_call.1} parent=1 // pred_check
      _
    $region11: #{tpu_custom_call.1} parent=1 // pred_check_branch
      %20 = sbr.rel (0) target = $region13
    $region12: #{tpu_custom_call.1} parent=1 // pred_region
      _
    $region13: #{tpu_custom_call.1} parent=1 // pred_fallthru
      _
    // Predicated region
    $region14: #{tpu_custom_call.1} parent=1 // pred_check
      _
    $region15: #{tpu_custom_call.1} parent=1 // pred_check_branch
      %22 = sbr.rel (0) target = $region17
    $region16: #{tpu_custom_call.1} parent=1 // pred_region
      %s24 = ssub.s32 2048, 2048
      %25 = vsyncadd [#allocation8], %s24
      %s26 = sshll.u32 [#allocation7], 4
      %s27 = int_to_ptr.vmem [resolvable:$true] %s26
      %32 = dma.hbm_to_vmem [thread:$0]  %s4, 2048, %s27, [#allocation8], 128, 128, 8
    $region17: #{tpu_custom_call.1} parent=1 // pred_fallthru
      _
    // Predicated region
    $region18: #{tpu_custom_call.1} parent=1 // pred_check
      _
    $region19: #{tpu_custom_call.1} parent=1 // pred_check_branch
      %34 = sbr.rel (0) target = $region21
    $region20: #{tpu_custom_call.1} parent=1 // pred_region
      %s36 = ssub.s32 2048, 2048
      %37 = vsyncadd [#allocation11], %s36
      %s38 = sshll.u32 [#allocation10], 4
      %s39 = int_to_ptr.vmem [resolvable:$true] %s38
      %44 = dma.hbm_to_vmem [thread:$0]  %s5, 2048, %s39, [#allocation11], 128, 128, 8
    $region21: #{tpu_custom_call.1} parent=1 // pred_fallthru
      _
    // Predicated region
    $region22: #{tpu_custom_call.1} parent=1 // pred_check
      _
    $region23: #{tpu_custom_call.1} parent=1 // pred_check_branch
      %46 = sbr.rel (0) target = $region25
    $region24: #{tpu_custom_call.1} parent=1 // pred_region
      %47 = dma.done [#allocation8], 2048
    $region25: #{tpu_custom_call.1} parent=1 // pred_fallthru
      _
    // Predicated region
    $region26: #{tpu_custom_call.1} parent=1 // pred_check
      _
    $region27: #{tpu_custom_call.1} parent=1 // pred_check_branch
      %49 = sbr.rel (0) target = $region29
    $region28: #{tpu_custom_call.1} parent=1 // pred_region
      %50 = dma.done [#allocation11], 2048
    $region29: #{tpu_custom_call.1} parent=1 // pred_fallthru
      _
    %p51 = scmp.eq.s32.totalorder 0, 0
    // Predicated region
    $region30: #{tpu_custom_call.1} parent=1 // pred_check
      %p52 = pneg %p51
    $region31: #{tpu_custom_call.1} parent=1 // pred_check_branch
      %54 = sbr.rel (%p52) target = $region33
    $region32: #{tpu_custom_call.1} parent=1 // pred_region
      %vm55 = vcmask 7168
      %56 = vst.msk [vmem:[#allocation2] sm:$0xff] %vm55, -inf
      %57 = vst.msk [vmem:[#allocation3] sm:$0xff] %vm55, 0.0
      %58 = vst [vmem:[#allocation4] sm:$0xff] 0.0
    $region33: #{tpu_custom_call.1} parent=1 // pred_fallthru
      _
    %v59 = vld [vmem:[%s3] sm:$0xff]
    %v60 = vld [vmem:[#allocation7] sm:$0xff]
    %v61 = vld [vmem:[#allocation7 + $0x8] sm:$0xff]
    %v62 = vld [vmem:[#allocation7 + $0x10] sm:$0xff]
    %v63 = vld [vmem:[#allocation7 + $0x18] sm:$0xff]
    %v64 = vld [vmem:[#allocation7 + $0x20] sm:$0xff]
    %v65 = vld [vmem:[#allocation7 + $0x28] sm:$0xff]
    %v66 = vld [vmem:[#allocation7 + $0x30] sm:$0xff]
    %v67 = vld [vmem:[#allocation7 + $0x38] sm:$0xff]
    %v68 = vld [vmem:[#allocation7 + $0x40] sm:$0xff]
    %v69 = vld [vmem:[#allocation7 + $0x48] sm:$0xff]
    %v70 = vld [vmem:[#allocation7 + $0x50] sm:$0xff]
    %v71 = vld [vmem:[#allocation7 + $0x58] sm:$0xff]
    %v72 = vld [vmem:[#allocation7 + $0x60] sm:$0xff]
    %v73 = vld [vmem:[#allocation7 + $0x68] sm:$0xff]
    %v74 = vld [vmem:[#allocation7 + $0x70] sm:$0xff]
    %v75 = vld [vmem:[#allocation7 + $0x78] sm:$0xff]
    %76 = vmatprep.subr.mxu0 0.0
    %77 = vmatpush1.xpose.msra.mxu0 %v75
    %78 = vmatprep.subr.mxu0 0.0
    %79 = vmatpush1.xpose.msra.mxu0 %v74
    %80 = vmatprep.subr.mxu0 0.0
    %81 = vmatpush1.xpose.msra.mxu0 %v73
    %82 = vmatprep.subr.mxu0 0.0
    %83 = vmatpush1.xpose.msra.mxu0 %v72
    %84 = vmatprep.subr.mxu0 0.0
    %85 = vmatpush1.xpose.msra.mxu0 %v71
    %86 = vmatprep.subr.mxu0 0.0
    %87 = vmatpush1.xpose.msra.mxu0 %v70
    %88 = vmatprep.subr.mxu0 0.0
    %89 = vmatpush1.xpose.msra.mxu0 %v69
    %90 = vmatprep.subr.mxu0 0.0
    %91 = vmatpush1.xpose.msra.mxu0 %v68
    %92 = vmatprep.subr.mxu0 0.0
    %93 = vmatpush1.xpose.msra.mxu0 %v67
    %94 = vmatprep.subr.mxu0 0.0
    %95 = vmatpush1.xpose.msra.mxu0 %v66
    %96 = vmatprep.subr.mxu0 0.0
    %97 = vmatpush1.xpose.msra.mxu0 %v65
    %98 = vmatprep.subr.mxu0 0.0
    %99 = vmatpush1.xpose.msra.mxu0 %v64
    %100 = vmatprep.subr.mxu0 0.0
    %101 = vmatpush1.xpose.msra.mxu0 %v63
    %102 = vmatprep.subr.mxu0 0.0
    %103 = vmatpush1.xpose.msra.mxu0 %v62
    %104 = vmatprep.subr.mxu0 0.0
    %105 = vmatpush1.xpose.msra.mxu0 %v61
    %106 = vmatprep.subr.mxu0 0.0
    %107 = vmatpush1.xpose.msra.mxu0 %v60
    %108 = vmatprep.subr.mxu0 0.0
    %109 = vmatpush2.xpose.msra.mxu0 0.0
    %110 = vmatprep.subr.mxu0 0.0
    %111 = vmatpush2.xpose.msra.mxu0 0.0
    %112 = vmatprep.subr.mxu0 0.0
    %113 = vmatpush2.xpose.msra.mxu0 0.0
    %114 = vmatprep.subr.mxu0 0.0
    %115 = vmatpush2.xpose.msra.mxu0 0.0
    %116 = vmatprep.subr.mxu0 0.0
    %117 = vmatpush2.xpose.msra.mxu0 0.0
    %118 = vmatprep.subr.mxu0 0.0
    %119 = vmatpush2.xpose.msra.mxu0 0.0
    %120 = vmatprep.subr.mxu0 0.0
    %121 = vmatpush2.xpose.msra.mxu0 0.0
    %122 = vmatprep.subr.mxu0 0.0
    %123 = vmatpush2.xpose.msra.mxu0 0.0
    %124 = vmatprep.subr.mxu0 0.0
    %125 = vmatpush2.xpose.msra.mxu0 0.0
    %126 = vmatprep.subr.mxu0 0.0
    %127 = vmatpush2.xpose.msra.mxu0 0.0
    %128 = vmatprep.subr.mxu0 0.0
    %129 = vmatpush2.xpose.msra.mxu0 0.0
    %130 = vmatprep.subr.mxu0 0.0
    %131 = vmatpush2.xpose.msra.mxu0 0.0
    %132 = vmatprep.subr.mxu0 0.0
    %133 = vmatpush2.xpose.msra.mxu0 0.0
    %134 = vmatprep.subr.mxu0 0.0
    %135 = vmatpush2.xpose.msra.mxu0 0.0
    %136 = vmatprep.subr.mxu0 0.0
    %137 = vmatpush2.xpose.msra.mxu0 0.0
    %138 = vmatprep.subr.mxu0 0.0
    %139 = vmatpush2.xpose.msra.mxu0 0.0
    %140 = vmatprep.mubr.f32.mxu0 0.0
    %141 = vmatmul.mubr.f32.gmra.mxu0 %v59
    %v142 = vpop.f32.mrf.mxu0
    %v143 = vadd.f32 0.0, %v142
    %v144 = vpop.f32.mrf.mxu0
    %145 = vdwg.mxu0
    %v146 = vld [vmem:[%s1] sm:$0xff]
    %v147 = vld [vmem:[%s2] sm:$0x1]
    %149 = vset.pattern.permute.xlu0 0
    %150 = vperm.xlu0 %149, %v146
    %v151 = vpop.permute.xlu0 %150
    %v154 = vlaneseq
    %v155 = vshrl.u32 %v154, 7
    %v156 = vsub.s32 0, %v155
    %v157 = vrot.slane %v147, %v156
    %v159 = vadd.f32 %v151, %v157
    %v160 = vmul.f32 %v143, 2.0
    %v161 = vsub.f32 %v159, %v160
    %v162 = vmax.f32 %v161, 0.0
    %v163 = vrsqrt.pop %v162
    %v164 = vmul.f32 %v162, %v163
    %vm165 = vcmp.eq.f32.partialorder %v162, inf
    %v166 = vsel %vm165, %v162, %v164
    %vm167 = vcmp.eq.f32.partialorder %v162, 0.0
    %v168 = vand.u32 %v162, 2147483648
    %v169 = vsel %vm167, %v168, %v166
    %v170 = vsub.f32 0.0, %v169
    %v171 = vlaneseq
    %v172 = vand.u32 %v171, 127
    %s173 = smul.u32 0, 128
    %v174 = vstv %s173
    %v175 = vadd.s32 %v172, %v174
    %vm176 = vcmp.lt.s32.totalorder %v175, 8
    %v177 = vsel %vm176, %v170, -inf
    %v178 = vlaneseq
    %v179 = vshrl.u32 %v178, 7
    %s180 = smul.u32 0, 8
    %v181 = vstv %s180
    %v182 = vadd.s32 %v179, %v181
    %s183 = sld [smem:[#allocation6]]
    %p184 = scmp.eq.s32.totalorder %s183, 1
    %vm185 = vcmp.eq.s32.totalorder %v182, %v175
    %s186 = scalar_select %p184, 1, 0
    %v187 = vstv %s186
    %vm188 = vcmp.eq.s32.totalorder %v187, 1
    %vm189 = vmand %vm188, %vm185
    %v190 = vsel %vm189, -inf, %v177
    %v191 = vld [vmem:[#allocation2] sm:$0xff]
    %192 = vmax.xlane.f32.xlu0 %v190
    %v193 = vpop.xlane.xlu0 %192
    %v194 = vmax.f32 %v191, %v193
    %v195 = vsub.f32 %v191, %v194
    %v196 = vmul.f32 %v195, 1.442695
    %v197 = vpow.pop %v196
    %199 = vset.pattern.permute.xlu0 0
    %200 = vperm.xlu0 %199, %v194
    %v201 = vpop.permute.xlu0 %200
    %v203 = vsub.f32 %v190, %v201
    %v204 = vmul.f32 %v203, 1.442695
    %v205 = vpow.pop %v204
    %v206 = vld [vmem:[#allocation3] sm:$0xff]
    %v207 = vmul.f32 %v197, %v206
    %208 = vadd.xlane.f32.xlu0 %v205
    %v209 = vpop.xlane.xlu0 %208
    %v210 = vadd.f32 %v207, %v209
    %vm211 = vcmask 7168
    %212 = vst.msk [vmem:[#allocation3] sm:$0xff] %vm211, %v210
    %v213 = vld [vmem:[#allocation4] sm:$0xff]
    %215 = vset.pattern.permute.xlu0 0
    %216 = vperm.xlu0 %215, %v197
    %v217 = vpop.permute.xlu0 %216
    %v219 = vmul.f32 %v217, %v213
    %v220 = vld [vmem:[#allocation10] sm:$0xff]
    %v221 = vld [vmem:[#allocation10 + $0x8] sm:$0xff]
    %v222 = vld [vmem:[#allocation10 + $0x10] sm:$0xff]
    %v223 = vld [vmem:[#allocation10 + $0x18] sm:$0xff]
    %v224 = vld [vmem:[#allocation10 + $0x20] sm:$0xff]
    %v225 = vld [vmem:[#allocation10 + $0x28] sm:$0xff]
    %v226 = vld [vmem:[#allocation10 + $0x30] sm:$0xff]
    %v227 = vld [vmem:[#allocation10 + $0x38] sm:$0xff]
    %v228 = vld [vmem:[#allocation10 + $0x40] sm:$0xff]
    %v229 = vld [vmem:[#allocation10 + $0x48] sm:$0xff]
    %v230 = vld [vmem:[#allocation10 + $0x50] sm:$0xff]
    %v231 = vld [vmem:[#allocation10 + $0x58] sm:$0xff]
    %v232 = vld [vmem:[#allocation10 + $0x60] sm:$0xff]
    %v233 = vld [vmem:[#allocation10 + $0x68] sm:$0xff]
    %v234 = vld [vmem:[#allocation10 + $0x70] sm:$0xff]
    %v235 = vld [vmem:[#allocation10 + $0x78] sm:$0xff]
    %236 = vmatprep.subr.mxu0 0.0
    %237 = vmatpush1.msra.mxu0 %v235
    %238 = vmatprep.subr.mxu0 0.0
    %239 = vmatpush1.msra.mxu0 %v234
    %240 = vmatprep.subr.mxu0 0.0
    %241 = vmatpush1.msra.mxu0 %v233
    %242 = vmatprep.subr.mxu0 0.0
    %243 = vmatpush1.msra.mxu0 %v232
    %244 = vmatprep.subr.mxu0 0.0
    %245 = vmatpush1.msra.mxu0 %v231
    %246 = vmatprep.subr.mxu0 0.0
    %247 = vmatpush1.msra.mxu0 %v230
    %248 = vmatprep.subr.mxu0 0.0
    %249 = vmatpush1.msra.mxu0 %v229
    %250 = vmatprep.subr.mxu0 0.0
    %251 = vmatpush1.msra.mxu0 %v228
    %252 = vmatprep.subr.mxu0 0.0
    %253 = vmatpush1.msra.mxu0 %v227
    %254 = vmatprep.subr.mxu0 0.0
    %255 = vmatpush1.msra.mxu0 %v226
    %256 = vmatprep.subr.mxu0 0.0
    %257 = vmatpush1.msra.mxu0 %v225
    %258 = vmatprep.subr.mxu0 0.0
    %259 = vmatpush1.msra.mxu0 %v224
    %260 = vmatprep.subr.mxu0 0.0
    %261 = vmatpush1.msra.mxu0 %v223
    %262 = vmatprep.subr.mxu0 0.0
    %263 = vmatpush1.msra.mxu0 %v222
    %264 = vmatprep.subr.mxu0 0.0
    %265 = vmatpush1.msra.mxu0 %v221
    %266 = vmatprep.subr.mxu0 0.0
    %267 = vmatpush1.msra.mxu0 %v220
    %268 = vmatprep.subr.mxu0 0.0
    %269 = vmatpush2.msra.mxu0 0.0
    %270 = vmatprep.subr.mxu0 0.0
    %271 = vmatpush2.msra.mxu0 0.0
    %272 = vmatprep.subr.mxu0 0.0
    %273 = vmatpush2.msra.mxu0 0.0
    %274 = vmatprep.subr.mxu0 0.0
    %275 = vmatpush2.msra.mxu0 0.0
    %276 = vmatprep.subr.mxu0 0.0
    %277 = vmatpush2.msra.mxu0 0.0
    %278 = vmatprep.subr.mxu0 0.0
    %279 = vmatpush2.msra.mxu0 0.0
    %280 = vmatprep.subr.mxu0 0.0
    %281 = vmatpush2.msra.mxu0 0.0
    %282 = vmatprep.subr.mxu0 0.0
    %283 = vmatpush2.msra.mxu0 0.0
    %284 = vmatprep.subr.mxu0 0.0
    %285 = vmatpush2.msra.mxu0 0.0
    %286 = vmatprep.subr.mxu0 0.0
    %287 = vmatpush2.msra.mxu0 0.0
    %288 = vmatprep.subr.mxu0 0.0
    %289 = vmatpush2.msra.mxu0 0.0
    %290 = vmatprep.subr.mxu0 0.0
    %291 = vmatpush2.msra.mxu0 0.0
    %292 = vmatprep.subr.mxu0 0.0
    %293 = vmatpush2.msra.mxu0 0.0
    %294 = vmatprep.subr.mxu0 0.0
    %295 = vmatpush2.msra.mxu0 0.0
    %296 = vmatprep.subr.mxu0 0.0
    %297 = vmatpush2.msra.mxu0 0.0
    %298 = vmatprep.subr.mxu0 0.0
    %299 = vmatpush2.msra.mxu0 0.0
    %300 = vmatprep.mubr.f32.mxu0 0.0
    %301 = vmatmul.mubr.f32.gmra.mxu0 %v205
    %v302 = vpop.f32.mrf.mxu0
    %v303 = vadd.f32 0.0, %v302
    %v304 = vpop.f32.mrf.mxu0
    %305 = vdwg.mxu0
    %v306 = vadd.f32 %v219, %v303
    %307 = vst [vmem:[#allocation4] sm:$0xff] %v306
    %308 = vst.msk [vmem:[#allocation2] sm:$0xff] %vm211, %v194
    // Predicated region
    $region34: #{tpu_custom_call.1} parent=1 // pred_check
      %p309 = pneg %p51
    $region35: #{tpu_custom_call.1} parent=1 // pred_check_branch
      %311 = sbr.rel (%p309) target = $region37
    $region36: #{tpu_custom_call.1} parent=1 // pred_region
      %v312 = vld [vmem:[#allocation3] sm:$0xff]
      %v313 = vrcp.pop %v312
      %v314 = vld [vmem:[#allocation4] sm:$0xff]
      %316 = vset.pattern.permute.xlu0 0
      %317 = vperm.xlu0 %316, %v313
      %v318 = vpop.permute.xlu0 %317
      %v320 = vmul.f32 %v314, %v318
      %v321 = vmax.f32 %v320, 0.0
      %v322 = vmin.f32 %v321, 1.0
      %323 = vst [vmem:[#allocation12] sm:$0xff] %v322
    $region37: #{tpu_custom_call.1} parent=1 // pred_fallthru
      _
    // Predicated region
    $region38: #{tpu_custom_call.1} parent=1 // pred_check
      _
    $region39: #{tpu_custom_call.1} parent=1 // pred_check_branch
      %325 = sbr.rel (0) target = $region41
    $region40: #{tpu_custom_call.1} parent=1 // pred_region
      %s327 = ssub.s32 128, 128
      %328 = vsyncadd [#allocation9], %s327
      %s330 = sshll.u32 [#allocation12], 4
      %s331 = int_to_ptr.vmem [resolvable:$true] %s330
      %333 = dma.vmem_to_hbm [thread:$0]  %s331, 128, %s6, [#allocation9]
    $region41: #{tpu_custom_call.1} parent=1 // pred_fallthru
      _
    // Predicated region
    $region42: #{tpu_custom_call.1} parent=1 // pred_check
      _
    $region43: #{tpu_custom_call.1} parent=1 // pred_check_branch
      %335 = sbr.rel (0) target = $region45
    $region44: #{tpu_custom_call.1} parent=1 // pred_region
      %336 = dma.done [#allocation9], 128
    $region45: #{tpu_custom_call.1} parent=1 // pred_fallthru
      _
    %337 = vsyncpa [#allocation8], 1
    %338 = vsyncpa [#allocation11], 1
    %339 = vsyncpa [#allocation9], 1

</llo_original>
